<compile_context>
chip_gen: v7x
topology: tpu7x:2x2x1
jax: 0.10.0
libtpu: 0.0.40
codegen_flags: <defaults>
</compile_context>

<pallas_src>
import functools

import jax
import jax.numpy as jnp
from jax.experimental import pallas as pl
from jax.experimental.pallas import tpu as pltpu


# ---------------------------------------------------------------------------
# Shared epilogue: batched MLP over (avg, max) pooled vectors -> sigmoid gate.
# ---------------------------------------------------------------------------
def _mlp_gate(avg, mx, w1, b1, w2, b2):
    """avg, mx: (C, 1) f32. Returns the (C, 1) sigmoid gate."""
    C = avg.shape[0]
    # Batch the two pooled vectors as a (C, 2) RHS so W1 runs once on the MXU.
    # Built with a select (not a lane concat) for robust Mosaic lowering.
    col = jax.lax.broadcasted_iota(jnp.int32, (C, 2), 1)
    pooled = jnp.where(col == 0, avg, mx)                                 # (C, 2)
    hid = jnp.dot(w1, pooled, preferred_element_type=jnp.float32) + b1    # (Cr, 2)
    hid = jnp.maximum(hid, 0.0)                                           # ReLU
    # mlp(avg) + mlp(max) == W2 @ (h_avg + h_max) + 2 * b2
    hsum = jnp.sum(hid, axis=1, keepdims=True)                            # (Cr, 1)
    att = jnp.dot(w2, hsum, preferred_element_type=jnp.float32) + 2.0 * b2
    return 1.0 / (1.0 + jnp.exp(-att))                                    # (C, 1)


# ---------------------------------------------------------------------------
# Resident fused kernel: whole (C, HW) batch slab lives in VMEM.
# ---------------------------------------------------------------------------
def _fused_resident_kernel(inv_hw, x_ref, w1_ref, b1_ref, w2_ref, b2_ref,
                           out_ref):
    x = x_ref[0]                                                  # (C, HW) f32
    # Sum pool on the MXU (keeps the XLU free for the max reduce).
    ones = jnp.ones((x.shape[1], 1), jnp.float32)
    ssum = jnp.dot(x, ones, preferred_element_type=jnp.float32)   # (C, 1)
    smax = jnp.max(x, axis=1, keepdims=True)                      # (C, 1)
    gate = _mlp_gate(ssum * inv_hw, smax,
                     w1_ref[...], b1_ref[...], w2_ref[...], b2_ref[...])
    out_ref[0] = (x * gate).astype(out_ref.dtype)


# ---------------------------------------------------------------------------
# Streamed fallback kernel: grid=(N, 2, n_hw), phase 0 = pool, phase 1 = apply.
# ---------------------------------------------------------------------------
def _streamed_kernel(inv_hw, hw_total, needs_mask,
                     x_ref, w1_ref, b1_ref, w2_ref, b2_ref, out_ref,
                     psum_sc, pmax_sc, gate_sc):
    phase = pl.program_id(1)
    h = pl.program_id(2)
    last_h = pl.num_programs(2) - 1
    C, T = x_ref.shape[1], x_ref.shape[2]

    @pl.when(jnp.logical_and(phase == 0, h == 0))
    def _():
        psum_sc[...] = jnp.zeros_like(psum_sc)
        pmax_sc[...] = jnp.full_like(pmax_sc, -jnp.inf)

    @pl.when(phase == 0)
    def _():
        # Elementwise VPU accumulation into (C,128) partials; the single
        # cross-lane (XLU) reduce happens once per batch in the epilogue.
        if needs_mask:
            valid = hw_total - h * T
        for c in range(T // 128):
            sl = x_ref[0, :, c * 128:(c + 1) * 128]               # (C, 128)
            if needs_mask:
                lane = jax.lax.broadcasted_iota(jnp.int32, (C, 128), 1) + c * 128
                m = lane < valid
                psum_sc[...] += jnp.where(m, sl, 0.0)
                pmax_sc[...] = jnp.maximum(pmax_sc[...],
                                           jnp.where(m, sl, -jnp.inf))
            else:
                psum_sc[...] += sl
                pmax_sc[...] = jnp.maximum(pmax_sc[...], sl)

    @pl.when(jnp.logical_and(phase == 0, h == last_h))
    def _():
        avg = jnp.sum(psum_sc[...], axis=1, keepdims=True) * inv_hw   # (C, 1)
        mx = jnp.max(pmax_sc[...], axis=1, keepdims=True)             # (C, 1)
        gate_sc[...] = _mlp_gate(avg, mx, w1_ref[...], b1_ref[...],
                                 w2_ref[...], b2_ref[...])

    @pl.when(phase == 1)
    def _():
        # Minimal apply: 1 load, 1 broadcast-mul, 1 lane-dense store per vreg
        # (keeps v5e at the HBM roofline rather than vst-slot bound).
        out_ref[0] = (x_ref[0] * gate_sc[...]).astype(out_ref.dtype)


# ---------------------------------------------------------------------------
# Budgets / tiling.
# ---------------------------------------------------------------------------
def _vmem_budgets():
    """(vmem_limit, resident_budget, tile_budget) scaled to this chip's VMEM."""
    try:
        cap = int(pltpu.get_tpu_info().vmem_capacity_bytes)
    except Exception:
        cap = 64 * 1024 * 1024           # conservative: v7x per-core VMEM
    vmem_limit = (cap * 3) // 4          # 48 MiB on v7x, 96 MiB on v5e/v6e
    resident_budget = (cap * 5) // 8     # 40 MiB on v7x, 80 MiB on v5e/v6e
    tile_budget = (cap * 3) // 8         # 24 MiB on v7x, 48 MiB on v5e/v6e
    return vmem_limit, resident_budget, tile_budget


def _pick_hw_tile(c, tile_budget, max_hw_tile):
    """Largest multiple-of-128 HW tile whose double-buffered in+out working
    set (4 x (C,T) f32 buffers) fits the per-step budget.  No divisibility
    requirement on HW: the grid uses cdiv and the tail tile is masked."""
    t = tile_budget // (4 * c * 4)
    t = (min(t, max_hw_tile) // 128) * 128
    return max(t, 128)


def channel_gate(x, params, *, force_streamed=False, max_hw_tile=4096):
    """CBAM ChannelGate forward.  x: (N, C, H, W) f32, params = (w1, b1, w2, b2)."""
    w1, b1, w2, b2 = params
    N, C, H, W = x.shape
    Cr = w1.shape[0]
    HW = H * W
    inv_hw = 1.0 / HW

    x_flat = x.reshape(N, C, HW)
    b1c = b1.reshape(Cr, 1)
    b2c = b2.reshape(C, 1)

    vmem_limit, resident_budget, tile_budget = _vmem_budgets()
    per_batch_bytes = 4 * C * HW * 4                     # 2 in + 2 out buffers
    weight_bytes = 4 * 2 * (Cr * C + Cr + C * Cr + C)

    if (not force_streamed) and per_batch_bytes + weight_bytes <= resident_budget:
        # ---- Fully fused, x resident: one HBM read + one HBM write of x ----
        # TODO(synk): with N==1 on v7x only one TensorCore gets work; splitting
        # the HW sweep across cores with partial pools would recover that.
        out_flat = pl.pallas_call(
            functools.partial(_fused_resident_kernel, inv_hw),
            out_shape=jax.ShapeDtypeStruct((N, C, HW), x.dtype),
            grid=(N,),
            in_specs=[
                pl.BlockSpec((1, C, HW), lambda n: (n, 0, 0)),   # x slab
                pl.BlockSpec((Cr, C), lambda n: (0, 0)),         # W1
                pl.BlockSpec((Cr, 1), lambda n: (0, 0)),         # b1
                pl.BlockSpec((C, Cr), lambda n: (0, 0)),         # W2
                pl.BlockSpec((C, 1), lambda n: (0, 0)),          # b2
            ],
            out_specs=pl.BlockSpec((1, C, HW), lambda n: (n, 0, 0)),
            compiler_params=pltpu.CompilerParams(
                dimension_semantics=("parallel",),
                vmem_limit_bytes=vmem_limit),
            cost_estimate=pl.CostEstimate(
                flops=3 * N * C * HW + 8 * N * Cr * C,
                transcendentals=N * C,
                bytes_accessed=4 * (2 * N * C * HW + 2 * Cr * C + Cr + C)),
        )(x_flat, w1, b1c, w2, b2c)
    else:
        # ---- Streamed fallback: single kernel with a phase axis ------------
        T = _pick_hw_tile(C, tile_budget, max_hw_tile)
        n_hw = pl.cdiv(HW, T)
        needs_mask = (HW % T) != 0
        out_flat = pl.pallas_call(
            functools.partial(_streamed_kernel, inv_hw, HW, needs_mask),
            out_shape=jax.ShapeDtypeStruct((N, C, HW), x.dtype),
            grid=(N, 2, n_hw),
            in_specs=[
                pl.BlockSpec((1, C, T), lambda n, p, h: (n, 0, h)),   # x tile
                pl.BlockSpec((Cr, C), lambda n, p, h: (0, 0)),        # W1
                pl.BlockSpec((Cr, 1), lambda n, p, h: (0, 0)),        # b1
                pl.BlockSpec((C, Cr), lambda n, p, h: (0, 0)),        # W2
                pl.BlockSpec((C, 1), lambda n, p, h: (0, 0)),         # b2
            ],
            # Park the output window on block 0 during the pooling phase (no
            # intermediate HBM writeback); it advances with h only in phase 1.
            out_specs=pl.BlockSpec((1, C, T), lambda n, p, h: (n, 0, h * p)),
            scratch_shapes=[pltpu.VMEM((C, 128), jnp.float32),    # partial sum
                            pltpu.VMEM((C, 128), jnp.float32),    # partial max
                            pltpu.VMEM((C, 1), jnp.float32)],     # sigmoid gate
            compiler_params=pltpu.CompilerParams(
                dimension_semantics=("parallel", "arbitrary", "arbitrary"),
                vmem_limit_bytes=vmem_limit),
            cost_estimate=pl.CostEstimate(
                flops=3 * N * C * HW + 8 * N * Cr * C,
                transcendentals=N * C,
                bytes_accessed=4 * (3 * N * C * HW + 2 * Cr * C + Cr + C)),
        )(x_flat, w1, b1c, w2, b2c)

    return out_flat.reshape(N, C, H, W)


# ---------------------------------------------------------------------------
# Pure-JAX reference & params.
# ---------------------------------------------------------------------------
def channel_gate_ref(x, params):
    """Pure-JAX reference mirroring the PyTorch forward (avg + max pools)."""
    w1, b1, w2, b2 = params
    avg = x.mean(axis=(2, 3))                       # (N, C)
    mx = x.max(axis=(2, 3))                         # (N, C)

    def mlp(v):
        return jnp.maximum(v @ w1.T + b1, 0.0) @ w2.T + b2

    att = mlp(avg) + mlp(mx)
    scale = jax.nn.sigmoid(att)[:, :, None, None]
    return x * scale


def init_params(key, gate_channels, reduction_ratio=16):
    """Deterministic synthetic params (shapes match the PyTorch MLP)."""
    C = gate_channels
    Cr = max(1, C // reduction_ratio)
    ks = jax.random.split(key, 4)
    w1 = jax.random.normal(ks[0], (Cr, C), jnp.float32) * 0.2   # Linear(C, C/r)
    b1 = jax.random.normal(ks[1], (Cr,), jnp.float32) * 0.1
    w2 = jax.random.normal(ks[2], (C, Cr), jnp.float32) * 0.2   # Linear(C/r, C)
    b2 = jax.random.normal(ks[3], (C,), jnp.float32) * 0.1
    return (w1, b1, w2, b2)


if __name__ == "__main__":
    key = jax.random.PRNGKey(0)
    kx, kp, kx2 = jax.random.split(key, 3)

    # gate_channels=32, reduction_ratio=16 -> hidden width 2
    C = 32
    params = init_params(kp, C, reduction_ratio=16)

    # ---- Test 1: resident fused path (HW = 256 fits VMEM comfortably) ----
    N, H, W = 2, 16, 16
    x = jax.random.normal(kx, (N, C, H, W), jnp.float32)
    out = jax.block_until_ready(channel_gate(x, params))
    ref = channel_gate_ref(x, params)
    assert out.shape == (N, C, H, W)
    err = jnp.max(jnp.abs(out - ref))
    assert jnp.allclose(out, ref, atol=1e-4, rtol=1e-4), f"resident max abs err {err}"

    # ---- Test 2: streamed phase-axis path with a masked (non-128) tail ----
    N2, H2, W2 = 2, 16, 20        # HW = 320 -> tiles of 128 with a 64-lane tail
    x2 = jax.random.normal(kx2, (N2, C, H2, W2), jnp.float32)
    out2 = jax.block_until_ready(
        channel_gate(x2, params, force_streamed=True, max_hw_tile=128))
    ref2 = channel_gate_ref(x2, params)
    err2 = jnp.max(jnp.abs(out2 - ref2))
    assert jnp.allclose(out2, ref2, atol=1e-4, rtol=1e-4), f"streamed max abs err {err2}"

    print("KERNEL_OK")
</pallas_src>

<mosaic_0001>
module attributes {stable_mosaic.version = 11 : i64} {
  func.func @_fused_resident_kernel(%arg0: i32, %arg1: memref<1x32x256xf32, #tpu.memory_space<vmem>>, %arg2: memref<2x32xf32, #tpu.memory_space<vmem>>, %arg3: memref<2x1xf32, #tpu.memory_space<vmem>>, %arg4: memref<32x2xf32, #tpu.memory_space<vmem>>, %arg5: memref<32x1xf32, #tpu.memory_space<vmem>>, %arg6: memref<1x32x256xf32, #tpu.memory_space<vmem>>) attributes {dimension_semantics = [#tpu.dimension_semantics<parallel>], iteration_bounds = array<i64: 2>, scalar_prefetch = 0 : i64, scratch_operands = 0 : i64, tpu.core_type = #tpu.core_type<tc>, window_params = [{transform_indices = @transform_0, window_bounds = array<i64: 1, 32, 256>}, {pipeline_mode = #tpu.pipeline_mode<synchronous>, transform_indices = @transform_1, window_bounds = array<i64: 2, 32>}, {pipeline_mode = #tpu.pipeline_mode<synchronous>, transform_indices = @transform_2, window_bounds = array<i64: 2, 1>}, {pipeline_mode = #tpu.pipeline_mode<synchronous>, transform_indices = @transform_3, window_bounds = array<i64: 32, 2>}, {pipeline_mode = #tpu.pipeline_mode<synchronous>, transform_indices = @transform_4, window_bounds = array<i64: 32, 1>}, {transform_indices = @transform_5, window_bounds = array<i64: 1, 32, 256>}]} {
    %c0 = arith.constant 0 : index
    %c0_0 = arith.constant 0 : index
    %c0_1 = arith.constant 0 : index
    %0 = vector.load %arg1[%c0, %c0_0, %c0_1] : memref<1x32x256xf32, #tpu.memory_space<vmem>>, vector<1x32x256xf32>
    %1 = vector.shape_cast %0 : vector<1x32x256xf32> to vector<32x256xf32>
    %cst = arith.constant 1.000000e+00 : f32
    %2 = vector.broadcast %cst : f32 to vector<256x1xf32>
    %cst_2 = arith.constant dense<0.000000e+00> : vector<32x1xf32>
    %3 = tpu.matmul %1, %2, %cst_2 {dimension_numbers = #tpu.dot_dimension_numbers<[1], [0], [0], [1], [0, 0, 1, 1], [], []>} : vector<32x256xf32>, vector<256x1xf32>, vector<32x1xf32> -> vector<32x1xf32>
    %cst_3 = arith.constant dense<0xFF800000> : vector<32xf32>
    %4 = vector.multi_reduction <maximumf>, %1, %cst_3 [1] : vector<32x256xf32> to vector<32xf32>
    %5 = vector.shape_cast %4 : vector<32xf32> to vector<32x1xf32>
    %cst_4 = arith.constant 3.906250e-03 : f32
    %6 = vector.broadcast %cst_4 : f32 to vector<32x1xf32>
    %7 = arith.mulf %3, %6 : vector<32x1xf32>
    %c0_5 = arith.constant 0 : index
    %c0_6 = arith.constant 0 : index
    %8 = vector.load %arg2[%c0_5, %c0_6] : memref<2x32xf32, #tpu.memory_space<vmem>>, vector<2x32xf32>
    %c0_7 = arith.constant 0 : index
    %c0_8 = arith.constant 0 : index
    %9 = vector.load %arg3[%c0_7, %c0_8] : memref<2x1xf32, #tpu.memory_space<vmem>>, vector<2x1xf32>
    %c0_9 = arith.constant 0 : index
    %c0_10 = arith.constant 0 : index
    %10 = vector.load %arg4[%c0_9, %c0_10] : memref<32x2xf32, #tpu.memory_space<vmem>>, vector<32x2xf32>
    %c0_11 = arith.constant 0 : index
    %c0_12 = arith.constant 0 : index
    %11 = vector.load %arg5[%c0_11, %c0_12] : memref<32x1xf32, #tpu.memory_space<vmem>>, vector<32x1xf32>
    %12 = tpu.iota {dimensions = array<i32: 1>} : vector<32x2xi32>
    %c0_i32 = arith.constant 0 : i32
    %13 = vector.broadcast %c0_i32 : i32 to vector<32x2xi32>
    %14 = arith.cmpi eq, %12, %13 : vector<32x2xi32>
    %15 = vector.shape_cast %7 : vector<32x1xf32> to vector<32x1xf32>
    %16 = vector.broadcast %15 : vector<32x1xf32> to vector<32x2xf32>
    %17 = vector.shape_cast %5 : vector<32x1xf32> to vector<32x1xf32>
    %18 = vector.broadcast %17 : vector<32x1xf32> to vector<32x2xf32>
    %19 = arith.select %14, %16, %18 : vector<32x2xi1>, vector<32x2xf32>
    %cst_13 = arith.constant dense<0.000000e+00> : vector<2x2xf32>
    %20 = tpu.matmul %8, %19, %cst_13 {dimension_numbers = #tpu.dot_dimension_numbers<[1], [0], [0], [1], [0, 0, 1, 1], [], []>} : vector<2x32xf32>, vector<32x2xf32>, vector<2x2xf32> -> vector<2x2xf32>
    %21 = vector.broadcast %9 : vector<2x1xf32> to vector<2x2xf32>
    %22 = arith.addf %20, %21 : vector<2x2xf32>
    %cst_14 = arith.constant 0.000000e+00 : f32
    %23 = vector.broadcast %cst_14 : f32 to vector<2x2xf32>
    %24 = arith.maximumf %22, %23 : vector<2x2xf32>
    %cst_15 = arith.constant dense<0.000000e+00> : vector<2xf32>
    %25 = vector.multi_reduction <add>, %24, %cst_15 [1] : vector<2x2xf32> to vector<2xf32>
    %26 = vector.shape_cast %25 : vector<2xf32> to vector<2x1xf32>
    %cst_16 = arith.constant dense<0.000000e+00> : vector<32x1xf32>
    %27 = tpu.matmul %10, %26, %cst_16 {dimension_numbers = #tpu.dot_dimension_numbers<[1], [0], [0], [1], [0, 0, 1, 1], [], []>} : vector<32x2xf32>, vector<2x1xf32>, vector<32x1xf32> -> vector<32x1xf32>
    %cst_17 = arith.constant 2.000000e+00 : f32
    %28 = vector.broadcast %cst_17 : f32 to vector<32x1xf32>
    %29 = arith.mulf %28, %11 : vector<32x1xf32>
    %30 = arith.addf %27, %29 : vector<32x1xf32>
    %cst_18 = arith.constant 0.000000e+00 : f32
    %31 = vector.broadcast %cst_18 : f32 to vector<32x1xf32>
    %32 = arith.subf %31, %30 : vector<32x1xf32>
    %33 = math.exp %32 : vector<32x1xf32>
    %cst_19 = arith.constant 1.000000e+00 : f32
    %34 = vector.broadcast %cst_19 : f32 to vector<32x1xf32>
    %35 = arith.addf %34, %33 : vector<32x1xf32>
    %cst_20 = arith.constant 1.000000e+00 : f32
    %36 = vector.broadcast %cst_20 : f32 to vector<32x1xf32>
    %37 = arith.divf %36, %35 : vector<32x1xf32>
    %38 = vector.broadcast %37 : vector<32x1xf32> to vector<32x256xf32>
    %39 = arith.mulf %1, %38 : vector<32x256xf32>
    %c0_21 = arith.constant 0 : index
    %c0_22 = arith.constant 0 : index
    %c0_23 = arith.constant 0 : index
    %40 = vector.load %arg6[%c0_21, %c0_22, %c0_23] : memref<1x32x256xf32, #tpu.memory_space<vmem>>, vector<1x32x256xf32>
    %41 = vector.shape_cast %40 : vector<1x32x256xf32> to vector<32x256xf32>
    %42 = vector.shape_cast %39 : vector<32x256xf32> to vector<1x32x256xf32>
    tpu.vector_store %arg6[%c0_21, %c0_22, %c0_23], %42 {strides = array<i32>} : memref<1x32x256xf32, #tpu.memory_space<vmem>>, vector<1x32x256xf32>,
    return
  }
  func.func @transform_0(%arg0: i32) -> (i32, i32, i32) {
    %c0_i32 = arith.constant 0 : i32
    %c0_i32_0 = arith.constant 0 : i32
    %c0_i32_1 = arith.constant 0 : i32
    return %arg0, %c0_i32, %c0_i32_0 : i32, i32, i32
  }
  func.func @transform_1(%arg0: i32) -> (i32, i32) {
    %c0_i32 = arith.constant 0 : i32
    %c0_i32_0 = arith.constant 0 : i32
    %c0_i32_1 = arith.constant 0 : i32
    return %c0_i32, %c0_i32_0 : i32, i32
  }
  func.func @transform_2(%arg0: i32) -> (i32, i32) {
    %c0_i32 = arith.constant 0 : i32
    %c0_i32_0 = arith.constant 0 : i32
    %c0_i32_1 = arith.constant 0 : i32
    return %c0_i32, %c0_i32_0 : i32, i32
  }
  func.func @transform_3(%arg0: i32) -> (i32, i32) {
    %c0_i32 = arith.constant 0 : i32
    %c0_i32_0 = arith.constant 0 : i32
    %c0_i32_1 = arith.constant 0 : i32
    return %c0_i32, %c0_i32_0 : i32, i32
  }
  func.func @transform_4(%arg0: i32) -> (i32, i32) {
    %c0_i32 = arith.constant 0 : i32
    %c0_i32_0 = arith.constant 0 : i32
    %c0_i32_1 = arith.constant 0 : i32
    return %c0_i32, %c0_i32_0 : i32, i32
  }
  func.func @transform_5(%arg0: i32) -> (i32, i32, i32) {
    %c0_i32 = arith.constant 0 : i32
    %c0_i32_0 = arith.constant 0 : i32
    %c0_i32_1 = arith.constant 0 : i32
    return %arg0, %c0_i32, %c0_i32_0 : i32, i32, i32
  }
}

</mosaic_0001>

<llo_original>
// kernel: tpu_custom_call.1
$region0: #{tpu_custom_call.1}
  #allocation0 [shape = 'u32[]', space=smem, size = 0x4, offset = 0x4, fixed_abs, tag = 'smem constant byte address 0x4 - core index']
  #allocation1 [shape = 'u32[144,128]{1,0:T(1,128)}', space=vmem, size = 0x12000, scoped, tag = 'internal scratch']
  %s0 = inlined_call_operand.hbm [shape: f32[2,32,256], index: 0, kind: input, shape index: {}]
  %s1 = inlined_call_operand.vmem [shape: f32[2,32], index: 1, kind: input, shape index: {}]
  %s2 = inlined_call_operand.vmem [shape: f32[2,1], index: 2, kind: input, shape index: {}]
  %s3 = inlined_call_operand.vmem [shape: f32[32,2], index: 3, kind: input, shape index: {}]
  %s4 = inlined_call_operand.vmem [shape: f32[32,1], index: 4, kind: input, shape index: {}]
  %s5 = inlined_call_operand.hbm [shape: f32[2,32,256], index: 5, kind: output, shape index: {}]
  %s6 = sld [smem:[#allocation0]]
  $region57: #{tpu_custom_call.1} parent=0
    _
  %s8 = ssub.s32 1, %s6
  %s9 = scalar_select 0, %s8, %s6
  $region1: #{tpu_custom_call.1} parent=0
    #allocation2 [shape = 'u8[65536]{0}', space=vmem, size = 0x10000, scoped, tag = 'input window, operand 0']
    #allocation3 [shape = 's32[2]{0}', space=sflag, size = 0x8, scoped, tag = 'scoped memory for tpu_custom_call.1']
    #allocation4 [shape = 's32[2]{0}', space=sflag, size = 0x8, scoped, tag = 'scoped memory for tpu_custom_call.1']
    #allocation5 [shape = 'u8[65536]{0}', space=vmem, size = 0x10000, scoped, tag = 'output window, operand 0']
    %10 = vsyncpa [#allocation3], 0
    %s11 = scalar_lea.sflag [#allocation3], 1
    %12 = vsyncpa %s11, 0
    %13 = vsyncpa [#allocation4], 0
    %s14 = scalar_lea.sflag [#allocation4], 1
    %15 = vsyncpa %s14, 0
    loop: start=0, step=1, limit=4
    $region2: #{tpu_custom_call.1} parent=1 // loop_pre_header
      _
    $region3: #{tpu_custom_call.1} parent=1 // loop_header
      %s17 = sphi 0, %s21
      %p18 = scmp.ge.s32.totalorder %s17, 4
      %s27 = sphi 0, %s29
      %s30 = sphi 0, %s27
      %s31 = sphi 0, %s30
      %s47 = sphi 0, %s31
      %s51 = sphi 0, %s51
      %s53 = sphi 0, %s51
      %s54 = sphi 0, %s53
      %s68 = sphi 0, %s54
      %s72 = sphi 0, %s72
      %s74 = sphi 0, %s72
      %s75 = sphi 0, %s74
      %s89 = sphi 0, %s75
      %s93 = sphi 0, %s93
      %s95 = sphi 0, %s93
      %s96 = sphi 0, %s95
      %s110 = sphi 0, %s96
      %s114 = sphi 0, %s114
      %s116 = sphi 0, %s114
      %s117 = sphi 0, %s116
      %s131 = sphi 0, %s117
      %s137 = sphi 0, %s139
      %s140 = sphi 0, %s137
      %s141 = sphi 0, %s140
      %s157 = sphi 0, %s141
    $region4: #{tpu_custom_call.1} parent=1 // loop_header_branch
      %20 = sbr.rel (%p18) target = $region8
    $region5: #{tpu_custom_call.1} parent=1 // loop_body
      %s22 = ssub.s32 %s17, 1
      %s23 = ssub.s32 %s17, 2
      %s24 = sadd.s32 %s17, 1
      %s25 = ssub.s32 %s17, %s24
      %p26 = scmp.eq.s32.totalorder %s25, 0
      %s28 = sadd.s32 %s27, 1
      %s29 = scalar_select %p26, %s27, %s28
      %p32 = pneg %p26
      %p33 = scmp.eq.s32.totalorder %s17, 1
      %p34 = por %p32, %p33
      %p35 = scmp.ne.s32.totalorder %s27, %s30
      %p36 = scmp.eq.s32.totalorder %s17, 0
      %p37 = por %p35, %p36
      %p38 = scmp.ne.s32.totalorder %s27, %s30
      %p39 = scmp.eq.s32.totalorder %s22, 1
      %p40 = por %p38, %p39
      %p41 = scmp.ne.s32.totalorder %s30, %s31
      %p42 = scmp.eq.s32.totalorder %s22, 0
      %p43 = por %p41, %p42
      %p44 = scmp.ne.s32.totalorder %s30, %s31
      %p45 = scmp.eq.s32.totalorder %s23, 1
      %p46 = por %p44, %p45
      %p48 = scmp.ne.s32.totalorder %s31, %s47
      %p49 = scmp.eq.s32.totalorder %s23, 0
      %p50 = por %p48, %p49
      %s52 = sadd.s32 %s51, 1
      %p55 = scmp.eq.s32.totalorder %s17, 1
      %p56 = scmp.ne.s32.totalorder %s51, %s53
      %p57 = scmp.eq.s32.totalorder %s17, 0
      %p58 = por %p56, %p57
      %p59 = scmp.ne.s32.totalorder %s51, %s53
      %p60 = scmp.eq.s32.totalorder %s22, 1
      %p61 = por %p59, %p60
      %p62 = scmp.ne.s32.totalorder %s53, %s54
      %p63 = scmp.eq.s32.totalorder %s22, 0
      %p64 = por %p62, %p63
      %p65 = scmp.ne.s32.totalorder %s53, %s54
      %p66 = scmp.eq.s32.totalorder %s23, 1
      %p67 = por %p65, %p66
      %p69 = scmp.ne.s32.totalorder %s54, %s68
      %p70 = scmp.eq.s32.totalorder %s23, 0
      %p71 = por %p69, %p70
      %s73 = sadd.s32 %s72, 1
      %p76 = scmp.eq.s32.totalorder %s17, 1
      %p77 = scmp.ne.s32.totalorder %s72, %s74
      %p78 = scmp.eq.s32.totalorder %s17, 0
      %p79 = por %p77, %p78
      %p80 = scmp.ne.s32.totalorder %s72, %s74
      %p81 = scmp.eq.s32.totalorder %s22, 1
      %p82 = por %p80, %p81
      %p83 = scmp.ne.s32.totalorder %s74, %s75
      %p84 = scmp.eq.s32.totalorder %s22, 0
      %p85 = por %p83, %p84
      %p86 = scmp.ne.s32.totalorder %s74, %s75
      %p87 = scmp.eq.s32.totalorder %s23, 1
      %p88 = por %p86, %p87
      %p90 = scmp.ne.s32.totalorder %s75, %s89
      %p91 = scmp.eq.s32.totalorder %s23, 0
      %p92 = por %p90, %p91
      %s94 = sadd.s32 %s93, 1
      %p97 = scmp.eq.s32.totalorder %s17, 1
      %p98 = scmp.ne.s32.totalorder %s93, %s95
      %p99 = scmp.eq.s32.totalorder %s17, 0
      %p100 = por %p98, %p99
      %p101 = scmp.ne.s32.totalorder %s93, %s95
      %p102 = scmp.eq.s32.totalorder %s22, 1
      %p103 = por %p101, %p102
      %p104 = scmp.ne.s32.totalorder %s95, %s96
      %p105 = scmp.eq.s32.totalorder %s22, 0
      %p106 = por %p104, %p105
      %p107 = scmp.ne.s32.totalorder %s95, %s96
      %p108 = scmp.eq.s32.totalorder %s23, 1
      %p109 = por %p107, %p108
      %p111 = scmp.ne.s32.totalorder %s96, %s110
      %p112 = scmp.eq.s32.totalorder %s23, 0
      %p113 = por %p111, %p112
      %s115 = sadd.s32 %s114, 1
      %p118 = scmp.eq.s32.totalorder %s17, 1
      %p119 = scmp.ne.s32.totalorder %s114, %s116
      %p120 = scmp.eq.s32.totalorder %s17, 0
      %p121 = por %p119, %p120
      %p122 = scmp.ne.s32.totalorder %s114, %s116
      %p123 = scmp.eq.s32.totalorder %s22, 1
      %p124 = por %p122, %p123
      %p125 = scmp.ne.s32.totalorder %s116, %s117
      %p126 = scmp.eq.s32.totalorder %s22, 0
      %p127 = por %p125, %p126
      %p128 = scmp.ne.s32.totalorder %s116, %s117
      %p129 = scmp.eq.s32.totalorder %s23, 1
      %p130 = por %p128, %p129
      %p132 = scmp.ne.s32.totalorder %s117, %s131
      %p133 = scmp.eq.s32.totalorder %s23, 0
      %p134 = por %p132, %p133
      %s135 = ssub.s32 %s17, %s24
      %p136 = scmp.eq.s32.totalorder %s135, 0
      %s138 = sadd.s32 %s137, 1
      %s139 = scalar_select %p136, %s137, %s138
      %p142 = pneg %p136
      %p143 = scmp.eq.s32.totalorder %s17, 1
      %p144 = por %p142, %p143
      %p145 = scmp.ne.s32.totalorder %s137, %s140
      %p146 = scmp.eq.s32.totalorder %s17, 0
      %p147 = por %p145, %p146
      %p148 = scmp.ne.s32.totalorder %s137, %s140
      %p149 = scmp.eq.s32.totalorder %s22, 1
      %p150 = por %p148, %p149
      %p151 = scmp.ne.s32.totalorder %s140, %s141
      %p152 = scmp.eq.s32.totalorder %s22, 0
      %p153 = por %p151, %p152
      %p154 = scmp.ne.s32.totalorder %s140, %s141
      %p155 = scmp.eq.s32.totalorder %s23, 1
      %p156 = por %p154, %p155
      %p158 = scmp.ne.s32.totalorder %s141, %s157
      %p159 = scmp.eq.s32.totalorder %s23, 0
      %p160 = por %p158, %p159
      %p161 = scmp.le.s32.totalorder 1, %s17
      %p162 = scmp.lt.s32.totalorder %s17, 3
      %p163 = pnand %p161, %p162
      %p164 = pneg %p163
      // Predicated region
      $region9: #{tpu_custom_call.1} parent=5 // pred_check
        _
      $region10: #{tpu_custom_call.1} parent=5 // pred_check_branch
        %166 = sbr.rel (%p163) target = $region12
      $region11: #{tpu_custom_call.1} parent=5 // pred_region
        %s167 = ssub.s32 %s17, 1
        // Predicated region
        $region13: #{tpu_custom_call.1} parent=11 // pred_check
          %p168 = pneg %p64
        $region14: #{tpu_custom_call.1} parent=11 // pred_check_branch
          %170 = sbr.rel (%p168) target = $region16
        $region15: #{tpu_custom_call.1} parent=11 // pred_region
          _
        $region16: #{tpu_custom_call.1} parent=11 // pred_fallthru
          _
        // Predicated region
        $region17: #{tpu_custom_call.1} parent=11 // pred_check
          %p171 = pneg %p85
        $region18: #{tpu_custom_call.1} parent=11 // pred_check_branch
          %173 = sbr.rel (%p171) target = $region20
        $region19: #{tpu_custom_call.1} parent=11 // pred_region
          _
        $region20: #{tpu_custom_call.1} parent=11 // pred_fallthru
          _
        // Predicated region
        $region21: #{tpu_custom_call.1} parent=11 // pred_check
          %p174 = pneg %p106
        $region22: #{tpu_custom_call.1} parent=11 // pred_check_branch
          %176 = sbr.rel (%p174) target = $region24
        $region23: #{tpu_custom_call.1} parent=11 // pred_region
          _
        $region24: #{tpu_custom_call.1} parent=11 // pred_fallthru
          _
        // Predicated region
        $region25: #{tpu_custom_call.1} parent=11 // pred_check
          %p177 = pneg %p127
        $region26: #{tpu_custom_call.1} parent=11 // pred_check_branch
          %179 = sbr.rel (%p177) target = $region28
        $region27: #{tpu_custom_call.1} parent=11 // pred_region
          _
        $region28: #{tpu_custom_call.1} parent=11 // pred_fallthru
          _
      $region12: #{tpu_custom_call.1} parent=5 // pred_fallthru
        _
      %p180 = scmp.lt.s32.totalorder %s17, 2
      // Predicated region
      $region29: #{tpu_custom_call.1} parent=5 // pred_check
        %p181 = pneg %p180
      $region30: #{tpu_custom_call.1} parent=5 // pred_check_branch
        %183 = sbr.rel (%p181) target = $region32
      $region31: #{tpu_custom_call.1} parent=5 // pred_region
        // Predicated region
        $region33: #{tpu_custom_call.1} parent=31 // pred_check
          %p184 = pneg %p37
        $region34: #{tpu_custom_call.1} parent=31 // pred_check_branch
          %186 = sbr.rel (%p184) target = $region36
        $region35: #{tpu_custom_call.1} parent=31 // pred_region
          %s187 = sand.u32 %s27, 1
          %s188 = scalar_lea.sflag [#allocation3], %s187
          %s189 = sand.u32 %s27, 1
          %s190 = smul.addr %s189, 64
          %s191 = scalar_lea.vmem [#allocation2], %s190
          %s193 = ssub.s32 1024, 1024
          %194 = vsyncadd %s188, %s193
          %s195 = smul.addr %s17, 8
          %s196 = smul.addr %s195, 128
          %s197 = scalar_lea.hbm %s0, %s196
          %s198 = sshll.u32 %s191, 4
          %s199 = int_to_ptr.vmem [resolvable:$true] %s198
          %204 = dma.hbm_to_vmem [thread:$0]  %s197, 1024, %s199, %s188, 256, 256, 16
        $region36: #{tpu_custom_call.1} parent=31 // pred_fallthru
          _
      $region32: #{tpu_custom_call.1} parent=5 // pred_fallthru
        _
      %p205 = scmp.le.s32.totalorder 1, %s17
      %p206 = scmp.lt.s32.totalorder %s17, 3
      %p207 = pnand %p205, %p206
      %p208 = pneg %p207
      // Predicated region
      $region37: #{tpu_custom_call.1} parent=5 // pred_check
        _
      $region38: #{tpu_custom_call.1} parent=5 // pred_check_branch
        %210 = sbr.rel (%p207) target = $region40
      $region39: #{tpu_custom_call.1} parent=5 // pred_region
        %s211 = ssub.s32 %s17, 1
        %s212 = sand.u32 %s30, 1
        %s213 = scalar_lea.sflag [#allocation3], %s212
        %s214 = sand.u32 %s30, 1
        %s215 = smul.addr %s214, 64
        %s216 = scalar_lea.vmem [#allocation2], %s215
        // Predicated region
        $region41: #{tpu_custom_call.1} parent=39 // pred_check
          %p217 = pneg %p43
        $region42: #{tpu_custom_call.1} parent=39 // pred_check_branch
          %219 = sbr.rel (%p217) target = $region44
        $region43: #{tpu_custom_call.1} parent=39 // pred_region
          %220 = dma.done %s213, 1024
        $region44: #{tpu_custom_call.1} parent=39 // pred_fallthru
          _
        %s221 = sand.u32 %s30, 1
        %s222 = scalar_lea.sflag [#allocation3], %s221
        %s223 = sand.u32 %s30, 1
        %s224 = smul.addr %s223, 64
        %s225 = scalar_lea.vmem [#allocation2], %s224
        %p226 = pneg %p43
        %p227 = pneg %p40
        %p228 = pneg %p64
        %p229 = pneg %p61
        %p230 = pneg %p85
        %p231 = pneg %p82
        %p232 = pneg %p106
        %p233 = pneg %p103
        %p234 = pneg %p127
        %p235 = pneg %p124
        %p236 = pneg %p153
        %p237 = pneg %p150
        %s238 = sand.u32 %s140, 1
        %s239 = scalar_lea.sflag [#allocation4], %s238
        %s240 = sand.u32 %s140, 1
        %s241 = smul.addr %s240, 64
        %s242 = scalar_lea.vmem [#allocation5], %s241
        %v243 = vld [vmem:[%s216] sm:$0xff]
        %v244 = vld [vmem:[%s216 + $0x8] sm:$0xff]
        %v245 = vld [vmem:[%s216 + $0x10] sm:$0xff]
        %v246 = vld [vmem:[%s216 + $0x18] sm:$0xff]
        %v247 = vld [vmem:[%s216 + $0x20] sm:$0xff]
        %v248 = vld [vmem:[%s216 + $0x28] sm:$0xff]
        %v249 = vld [vmem:[%s216 + $0x30] sm:$0xff]
        %v250 = vld [vmem:[%s216 + $0x38] sm:$0xff]
        %251 = vmatprep.subr.mxu0 0.0
        %252 = vmatpush1.msra.mxu0 1.0
        %253 = vmatprep.subr.mxu0 0.0
        %254 = vmatpush1.msra.mxu0 1.0
        %255 = vmatprep.subr.mxu0 0.0
        %256 = vmatpush1.msra.mxu0 1.0
        %257 = vmatprep.subr.mxu0 0.0
        %258 = vmatpush1.msra.mxu0 1.0
        %259 = vmatprep.subr.mxu0 0.0
        %260 = vmatpush1.msra.mxu0 1.0
        %261 = vmatprep.subr.mxu0 0.0
        %262 = vmatpush1.msra.mxu0 1.0
        %263 = vmatprep.subr.mxu0 0.0
        %264 = vmatpush1.msra.mxu0 1.0
        %265 = vmatprep.subr.mxu0 0.0
        %266 = vmatpush1.msra.mxu0 1.0
        %267 = vmatprep.subr.mxu0 0.0
        %268 = vmatpush1.msra.mxu0 1.0
        %269 = vmatprep.subr.mxu0 0.0
        %270 = vmatpush1.msra.mxu0 1.0
        %271 = vmatprep.subr.mxu0 0.0
        %272 = vmatpush1.msra.mxu0 1.0
        %273 = vmatprep.subr.mxu0 0.0
        %274 = vmatpush1.msra.mxu0 1.0
        %275 = vmatprep.subr.mxu0 0.0
        %276 = vmatpush1.msra.mxu0 1.0
        %277 = vmatprep.subr.mxu0 0.0
        %278 = vmatpush1.msra.mxu0 1.0
        %279 = vmatprep.subr.mxu0 0.0
        %280 = vmatpush1.msra.mxu0 1.0
        %281 = vmatprep.subr.mxu0 0.0
        %282 = vmatpush1.msra.mxu0 1.0
        %283 = vmatprep.subr.mxu0 0.0
        %284 = vmatpush1.msra.mxu0 1.0
        %285 = vmatprep.subr.mxu0 0.0
        %286 = vmatpush1.msra.mxu0 1.0
        %287 = vmatprep.subr.mxu0 0.0
        %288 = vmatpush1.msra.mxu0 1.0
        %289 = vmatprep.subr.mxu0 0.0
        %290 = vmatpush1.msra.mxu0 1.0
        %291 = vmatprep.subr.mxu0 0.0
        %292 = vmatpush1.msra.mxu0 1.0
        %293 = vmatprep.subr.mxu0 0.0
        %294 = vmatpush1.msra.mxu0 1.0
        %295 = vmatprep.subr.mxu0 0.0
        %296 = vmatpush1.msra.mxu0 1.0
        %297 = vmatprep.subr.mxu0 0.0
        %298 = vmatpush1.msra.mxu0 1.0
        %299 = vmatprep.subr.mxu0 0.0
        %300 = vmatpush1.msra.mxu0 1.0
        %301 = vmatprep.subr.mxu0 0.0
        %302 = vmatpush1.msra.mxu0 1.0
        %303 = vmatprep.subr.mxu0 0.0
        %304 = vmatpush1.msra.mxu0 1.0
        %305 = vmatprep.subr.mxu0 0.0
        %306 = vmatpush1.msra.mxu0 1.0
        %307 = vmatprep.subr.mxu0 0.0
        %308 = vmatpush1.msra.mxu0 1.0
        %309 = vmatprep.subr.mxu0 0.0
        %310 = vmatpush1.msra.mxu0 1.0
        %311 = vmatprep.subr.mxu0 0.0
        %312 = vmatpush1.msra.mxu0 1.0
        %313 = vmatprep.subr.mxu0 0.0
        %314 = vmatpush1.msra.mxu0 1.0
        %315 = vmatprep.mubr.f32.mxu0 %v244
        %316 = vmatmul.mubr.f32.gmra.mrb[0].mxu0 %v243
        %v317 = vpop.f32.mrb[0].mxu0
        %v318 = vadd.f32 0.0, %v317
        %v319 = vpop.f32.mrb[0].mxu0
        %320 = vmatprep.mubr.f32.mxu0 %v246
        %321 = vmatmul.mubr.f32.gmra.mrb[0].mxu0 %v245
        %v322 = vpop.f32.mrb[0].mxu0
        %v323 = vadd.f32 0.0, %v322
        %v324 = vpop.f32.mrb[0].mxu0
        %325 = vmatprep.mubr.f32.mxu0 %v248
        %326 = vmatmul.mubr.f32.gmra.mrb[0].mxu0 %v247
        %v327 = vpop.f32.mrb[0].mxu0
        %v328 = vadd.f32 0.0, %v327
        %v329 = vpop.f32.mrb[0].mxu0
        %330 = vmatprep.mubr.f32.mxu0 %v250
        %331 = vmatmul.mubr.f32.gmra.mrb[0].mxu0 %v249
        %v332 = vpop.f32.mrb[0].mxu0
        %v333 = vadd.f32 0.0, %v332
        %v334 = vpop.f32.mrb[0].mxu0
        %335 = vdwg.mxu0
        %v336 = vmax.f32 %v243, %v244
        %337 = vmax.xlane.f32.xlu0 %v336
        %v338 = vpop.xlane.xlu0 %337
        %v339 = vmax.f32 %v245, %v246
        %340 = vmax.xlane.f32.xlu0 %v339
        %v341 = vpop.xlane.xlu0 %340
        %v342 = vmax.f32 %v247, %v248
        %343 = vmax.xlane.f32.xlu0 %v342
        %v344 = vpop.xlane.xlu0 %343
        %v345 = vmax.f32 %v249, %v250
        %346 = vmax.xlane.f32.xlu0 %v345
        %v347 = vpop.xlane.xlu0 %346
        %v348 = vmul.f32 %v318, 0.00390625
        %v349 = vmul.f32 %v323, 0.00390625
        %v350 = vmul.f32 %v328, 0.00390625
        %v351 = vmul.f32 %v333, 0.00390625
        %v352 = vld [vmem:[%s1] sm:$0x3]
        %v353 = vld [vmem:[%s2] sm:$0x3]
        %v354 = vld [vmem:[%s3] sm:$0xff]
        %v355 = vld [vmem:[%s3 + $0x8] sm:$0xff]
        %v356 = vld [vmem:[%s3 + $0x10] sm:$0xff]
        %v357 = vld [vmem:[%s3 + $0x18] sm:$0xff]
        %v358 = vld [vmem:[%s4] sm:$0xff]
        %v359 = vld [vmem:[%s4 + $0x8] sm:$0xff]
        %v360 = vld [vmem:[%s4 + $0x10] sm:$0xff]
        %v361 = vld [vmem:[%s4 + $0x18] sm:$0xff]
        %v362 = vlaneseq
        %v363 = vand.u32 %v362, 127
        %vm364 = vcmp.eq.s32.totalorder %v363, 0
        %366 = vset.pattern.permute.xlu0 0
        %367 = vperm.xlu0 %366, %v348
        %v368 = vpop.permute.xlu0 %367
        %371 = vset.pattern.permute.xlu0 0
        %372 = vperm.xlu0 %371, %v349
        %v373 = vpop.permute.xlu0 %372
        %376 = vset.pattern.permute.xlu0 0
        %377 = vperm.xlu0 %376, %v350
        %v378 = vpop.permute.xlu0 %377
        %381 = vset.pattern.permute.xlu0 0
        %382 = vperm.xlu0 %381, %v351
        %v383 = vpop.permute.xlu0 %382
        %v385 = vsel %vm364, %v368, %v338
        %v386 = vsel %vm364, %v373, %v341
        %v387 = vsel %vm364, %v378, %v344
        %v388 = vsel %vm364, %v383, %v347
        %390 = vset.pattern.permute.xlu0 0
        %391 = vperm.xlu0 %390, %v353
        %v392 = vpop.permute.xlu0 %391
        %vm394 = vcmask 261120
        %v396 = vsel %vm394, %v352, 0
        %398 = vmatprep.subr.mxu0 0.0
        %399 = vmatpush1.msra.mxu0 %v385
        %400 = vmatprep.subr.mxu0 0.0
        %401 = vmatpush1.msra.mxu0 %v386
        %402 = vmatprep.subr.mxu0 0.0
        %403 = vmatpush1.msra.mxu0 %v387
        %404 = vmatprep.subr.mxu0 0.0
        %405 = vmatpush1.msra.mxu0 %v388
        %406 = vmatprep.subr.mxu0 0.0
        %407 = vmatpush1.msra.mxu0 0.0
        %408 = vmatprep.subr.mxu0 0.0
        %409 = vmatpush1.msra.mxu0 0.0
        %410 = vmatprep.subr.mxu0 0.0
        %411 = vmatpush1.msra.mxu0 0.0
        %412 = vmatprep.subr.mxu0 0.0
        %413 = vmatpush1.msra.mxu0 0.0
        %414 = vmatprep.subr.mxu0 0.0
        %415 = vmatpush1.msra.mxu0 0.0
        %416 = vmatprep.subr.mxu0 0.0
        %417 = vmatpush1.msra.mxu0 0.0
        %418 = vmatprep.subr.mxu0 0.0
        %419 = vmatpush1.msra.mxu0 0.0
        %420 = vmatprep.subr.mxu0 0.0
        %421 = vmatpush1.msra.mxu0 0.0
        %422 = vmatprep.subr.mxu0 0.0
        %423 = vmatpush1.msra.mxu0 0.0
        %424 = vmatprep.subr.mxu0 0.0
        %425 = vmatpush1.msra.mxu0 0.0
        %426 = vmatprep.subr.mxu0 0.0
        %427 = vmatpush1.msra.mxu0 0.0
        %428 = vmatprep.subr.mxu0 0.0
        %429 = vmatpush1.msra.mxu0 0.0
        %430 = vmatprep.subr.mxu0 0.0
        %431 = vmatpush1.msra.mxu0 0.0
        %432 = vmatprep.subr.mxu0 0.0
        %433 = vmatpush1.msra.mxu0 0.0
        %434 = vmatprep.subr.mxu0 0.0
        %435 = vmatpush1.msra.mxu0 0.0
        %436 = vmatprep.subr.mxu0 0.0
        %437 = vmatpush1.msra.mxu0 0.0
        %438 = vmatprep.subr.mxu0 0.0
        %439 = vmatpush1.msra.mxu0 0.0
        %440 = vmatprep.subr.mxu0 0.0
        %441 = vmatpush1.msra.mxu0 0.0
        %442 = vmatprep.subr.mxu0 0.0
        %443 = vmatpush1.msra.mxu0 0.0
        %444 = vmatprep.subr.mxu0 0.0
        %445 = vmatpush1.msra.mxu0 0.0
        %446 = vmatprep.subr.mxu0 0.0
        %447 = vmatpush1.msra.mxu0 0.0
        %448 = vmatprep.subr.mxu0 0.0
        %449 = vmatpush1.msra.mxu0 0.0
        %450 = vmatprep.subr.mxu0 0.0
        %451 = vmatpush1.msra.mxu0 0.0
        %452 = vmatprep.subr.mxu0 0.0
        %453 = vmatpush1.msra.mxu0 0.0
        %454 = vmatprep.subr.mxu0 0.0
        %455 = vmatpush1.msra.mxu0 0.0
        %456 = vmatprep.subr.mxu0 0.0
        %457 = vmatpush1.msra.mxu0 0.0
        %458 = vmatprep.subr.mxu0 0.0
        %459 = vmatpush1.msra.mxu0 0.0
        %460 = vmatprep.subr.mxu0 0.0
        %461 = vmatpush1.msra.mxu0 0.0
        %462 = vmatprep.mubr.f32.mxu0 0.0
        %463 = vmatmul.mubr.f32.gmra.mrb[0].mxu0 %v396
        %v464 = vpop.f32.mrb[0].mxu0
        %v465 = vadd.f32 %v392, %v464
        %v466 = vpop.f32.mrb[0].mxu0
        %467 = vdwg.mxu0
        %v468 = vmax.f32 %v465, 0.0
        %vm469 = vcmask 9216
        %v470 = vsel %vm469, %v468, 0.0
        %471 = vadd.xlane.f32.xlu0 %v470
        %v472 = vpop.xlane.xlu0 %471
        %v473 = vmul.f32 %v358, 2.0
        %v474 = vmul.f32 %v359, 2.0
        %v475 = vmul.f32 %v360, 2.0
        %v476 = vmul.f32 %v361, 2.0
        %vm477 = vcmask 15360
        %v479 = vsel %vm477, %v354, 0
        %v482 = vsel %vm477, %v355, 0
        %v485 = vsel %vm477, %v356, 0
        %v488 = vsel %vm477, %v357, 0
        %vm490 = vcmask 1041408
        %v492 = vsel %vm490, %v472, 0
        %494 = vmatprep.subr.mxu0 0.0
        %495 = vmatpush1.msra.mxu0 %v492
        %496 = vmatprep.subr.mxu0 0.0
        %497 = vmatpush1.msra.mxu0 0.0
        %498 = vmatprep.subr.mxu0 0.0
        %499 = vmatpush1.msra.mxu0 0.0
        %500 = vmatprep.subr.mxu0 0.0
        %501 = vmatpush1.msra.mxu0 0.0
        %502 = vmatprep.subr.mxu0 0.0
        %503 = vmatpush1.msra.mxu0 0.0
        %504 = vmatprep.subr.mxu0 0.0
        %505 = vmatpush1.msra.mxu0 0.0
        %506 = vmatprep.subr.mxu0 0.0
        %507 = vmatpush1.msra.mxu0 0.0
        %508 = vmatprep.subr.mxu0 0.0
        %509 = vmatpush1.msra.mxu0 0.0
        %510 = vmatprep.subr.mxu0 0.0
        %511 = vmatpush1.msra.mxu0 0.0
        %512 = vmatprep.subr.mxu0 0.0
        %513 = vmatpush1.msra.mxu0 0.0
        %514 = vmatprep.subr.mxu0 0.0
        %515 = vmatpush1.msra.mxu0 0.0
        %516 = vmatprep.subr.mxu0 0.0
        %517 = vmatpush1.msra.mxu0 0.0
        %518 = vmatprep.subr.mxu0 0.0
        %519 = vmatpush1.msra.mxu0 0.0
        %520 = vmatprep.subr.mxu0 0.0
        %521 = vmatpush1.msra.mxu0 0.0
        %522 = vmatprep.subr.mxu0 0.0
        %523 = vmatpush1.msra.mxu0 0.0
        %524 = vmatprep.subr.mxu0 0.0
        %525 = vmatpush1.msra.mxu0 0.0
        %526 = vmatprep.subr.mxu0 0.0
        %527 = vmatpush1.msra.mxu0 0.0
        %528 = vmatprep.subr.mxu0 0.0
        %529 = vmatpush1.msra.mxu0 0.0
        %530 = vmatprep.subr.mxu0 0.0
        %531 = vmatpush1.msra.mxu0 0.0
        %532 = vmatprep.subr.mxu0 0.0
        %533 = vmatpush1.msra.mxu0 0.0
        %534 = vmatprep.subr.mxu0 0.0
        %535 = vmatpush1.msra.mxu0 0.0
        %536 = vmatprep.subr.mxu0 0.0
        %537 = vmatpush1.msra.mxu0 0.0
        %538 = vmatprep.subr.mxu0 0.0
        %539 = vmatpush1.msra.mxu0 0.0
        %540 = vmatprep.subr.mxu0 0.0
        %541 = vmatpush1.msra.mxu0 0.0
        %542 = vmatprep.subr.mxu0 0.0
        %543 = vmatpush1.msra.mxu0 0.0
        %544 = vmatprep.subr.mxu0 0.0
        %545 = vmatpush1.msra.mxu0 0.0
        %546 = vmatprep.subr.mxu0 0.0
        %547 = vmatpush1.msra.mxu0 0.0
        %548 = vmatprep.subr.mxu0 0.0
        %549 = vmatpush1.msra.mxu0 0.0
        %550 = vmatprep.subr.mxu0 0.0
        %551 = vmatpush1.msra.mxu0 0.0
        %552 = vmatprep.subr.mxu0 0.0
        %553 = vmatpush1.msra.mxu0 0.0
        %554 = vmatprep.subr.mxu0 0.0
        %555 = vmatpush1.msra.mxu0 0.0
        %556 = vmatprep.subr.mxu0 0.0
        %557 = vmatpush1.msra.mxu0 0.0
        %558 = vmatprep.mubr.f32.mxu0 0.0
        %559 = vmatmul.mubr.f32.gmra.mrb[0].mxu0 %v479
        %v560 = vpop.f32.mrb[0].mxu0
        %v561 = vadd.f32 %v473, %v560
        %v562 = vpop.f32.mrb[0].mxu0
        %563 = vmatprep.mubr.f32.mxu0 0.0
        %564 = vmatmul.mubr.f32.gmra.mrb[0].mxu0 %v482
        %v565 = vpop.f32.mrb[0].mxu0
        %v566 = vadd.f32 %v474, %v565
        %v567 = vpop.f32.mrb[0].mxu0
        %568 = vmatprep.mubr.f32.mxu0 0.0
        %569 = vmatmul.mubr.f32.gmra.mrb[0].mxu0 %v485
        %v570 = vpop.f32.mrb[0].mxu0
        %v571 = vadd.f32 %v475, %v570
        %v572 = vpop.f32.mrb[0].mxu0
        %573 = vmatprep.mubr.f32.mxu0 0.0
        %574 = vmatmul.mubr.f32.gmra.mrb[0].mxu0 %v488
        %v575 = vpop.f32.mrb[0].mxu0
        %v576 = vadd.f32 %v476, %v575
        %v577 = vpop.f32.mrb[0].mxu0
        %578 = vdwg.mxu0
        %v579 = vsub.f32 0.0, %v561
        %v580 = vsub.f32 0.0, %v566
        %v581 = vsub.f32 0.0, %v571
        %v582 = vsub.f32 0.0, %v576
        %v583 = vmul.f32 %v579, 1.442695
        %v584 = vpow.pop %v583
        %v585 = vmul.f32 %v580, 1.442695
        %v586 = vpow.pop %v585
        %v587 = vmul.f32 %v581, 1.442695
        %v588 = vpow.pop %v587
        %v589 = vmul.f32 %v582, 1.442695
        %v590 = vpow.pop %v589
        %v591 = vadd.f32 %v584, 1.0
        %v592 = vadd.f32 %v586, 1.0
        %v593 = vadd.f32 %v588, 1.0
        %v594 = vadd.f32 %v590, 1.0
        %v595 = vrcp.pop %v591
        %v596 = vmul.f32 1.0, %v595
        %v597 = vrcp.pop %v592
        %v598 = vmul.f32 1.0, %v597
        %v599 = vrcp.pop %v593
        %v600 = vmul.f32 1.0, %v599
        %v601 = vrcp.pop %v594
        %v602 = vmul.f32 1.0, %v601
        %604 = vset.pattern.permute.xlu0 0
        %605 = vperm.xlu0 %604, %v596
        %v606 = vpop.permute.xlu0 %605
        %609 = vset.pattern.permute.xlu0 0
        %610 = vperm.xlu0 %609, %v598
        %v611 = vpop.permute.xlu0 %610
        %614 = vset.pattern.permute.xlu0 0
        %615 = vperm.xlu0 %614, %v600
        %v616 = vpop.permute.xlu0 %615
        %619 = vset.pattern.permute.xlu0 0
        %620 = vperm.xlu0 %619, %v602
        %v621 = vpop.permute.xlu0 %620
        %v623 = vmul.f32 %v243, %v606
        %v624 = vmul.f32 %v244, %v606
        %v625 = vmul.f32 %v245, %v611
        %v626 = vmul.f32 %v246, %v611
        %v627 = vmul.f32 %v247, %v616
        %v628 = vmul.f32 %v248, %v616
        %v629 = vmul.f32 %v249, %v621
        %v630 = vmul.f32 %v250, %v621
        %631 = vst [vmem:[%s242] sm:$0xff] %v623
        %632 = vst [vmem:[%s242 + $0x8] sm:$0xff] %v624
        %633 = vst [vmem:[%s242 + $0x10] sm:$0xff] %v625
        %634 = vst [vmem:[%s242 + $0x18] sm:$0xff] %v626
        %635 = vst [vmem:[%s242 + $0x20] sm:$0xff] %v627
        %636 = vst [vmem:[%s242 + $0x28] sm:$0xff] %v628
        %637 = vst [vmem:[%s242 + $0x30] sm:$0xff] %v629
        %638 = vst [vmem:[%s242 + $0x38] sm:$0xff] %v630
        %s639 = sand.u32 %s140, 1
        %s640 = scalar_lea.sflag [#allocation4], %s639
        %s641 = sand.u32 %s140, 1
        %s642 = smul.addr %s641, 64
        %s643 = scalar_lea.vmem [#allocation5], %s642
        // Predicated region
        $region45: #{tpu_custom_call.1} parent=39 // pred_check
          %p644 = pneg %p150
        $region46: #{tpu_custom_call.1} parent=39 // pred_check_branch
          %646 = sbr.rel (%p644) target = $region48
        $region47: #{tpu_custom_call.1} parent=39 // pred_region
          %s648 = ssub.s32 1024, 1024
          %649 = vsyncadd %s640, %s648
          %s650 = smul.addr %s22, 8
          %s651 = smul.addr %s650, 128
          %s652 = scalar_lea.hbm %s5, %s651
          %s653 = sshll.u32 %s643, 4
          %s654 = int_to_ptr.vmem [resolvable:$true] %s653
          %659 = dma.vmem_to_hbm [thread:$0]  %s654, 1024, %s652, %s640, 256, 256, 16
        $region48: #{tpu_custom_call.1} parent=39 // pred_fallthru
          _
      $region40: #{tpu_custom_call.1} parent=5 // pred_fallthru
        _
      %p660 = scmp.le.s32.totalorder 2, %s17
      // Predicated region
      $region49: #{tpu_custom_call.1} parent=5 // pred_check
        %p661 = pneg %p660
      $region50: #{tpu_custom_call.1} parent=5 // pred_check_branch
        %663 = sbr.rel (%p661) target = $region52
      $region51: #{tpu_custom_call.1} parent=5 // pred_region
        %s664 = ssub.s32 %s17, 2
        // Predicated region
        $region53: #{tpu_custom_call.1} parent=51 // pred_check
          %p665 = pneg %p156
        $region54: #{tpu_custom_call.1} parent=51 // pred_check_branch
          %667 = sbr.rel (%p665) target = $region56
        $region55: #{tpu_custom_call.1} parent=51 // pred_region
          %s668 = sand.u32 %s141, 1
          %s669 = scalar_lea.sflag [#allocation4], %s668
          %s670 = sand.u32 %s141, 1
          %s671 = smul.addr %s670, 64
          %s672 = scalar_lea.vmem [#allocation5], %s671
          %673 = dma.done %s669, 1024
        $region56: #{tpu_custom_call.1} parent=51 // pred_fallthru
          _
      $region52: #{tpu_custom_call.1} parent=5 // pred_fallthru
        _
    $region6: #{tpu_custom_call.1} parent=1 // loop_footer
      %s21 = sadd.s32 1, %s17
    $region7: #{tpu_custom_call.1} parent=1 // loop_footer_branch
      %16 = sbr.rel target = $region3
    $region8: #{tpu_custom_call.1} parent=1 // loop_exit
      _
    %674 = vsyncpa [#allocation3], 1
    %s675 = scalar_lea.sflag [#allocation3], 1
    %676 = vsyncpa %s675, 1
    %677 = vsyncpa [#allocation4], 1
    %s678 = scalar_lea.sflag [#allocation4], 1
    %679 = vsyncpa %s678, 1

</llo_original>
